<compile_context>
chip_gen: v7x
topology: tpu7x:2x2x1
jax: 0.10.0
libtpu: 0.0.40
codegen_flags: <defaults>
</compile_context>

<pallas_src>
import functools
import math

import jax
import jax.numpy as jnp
from jax import lax
from jax.experimental import pallas as pl
from jax.experimental.pallas import tpu as pltpu

IMG_H, IMG_W = 28, 28


def _gaussian_taps_1d(size: int, sigma: float):
    """1-D taps matching torch _gaussian_kernel (incl. exp(-((x-m)/(2*s))**2)).

    The module's 2-D kernel is outer(raw, raw)/sum(outer(raw, raw)), which is
    exactly outer(k1, k1) with k1 = raw/sum(raw); the two separable 1-D passes
    below therefore reproduce the same normalized kernel.
    """
    K = 2 * size + 1
    mean = (K - 1) / 2.0
    raw = [
        1.0 / (sigma * math.sqrt(2.0 * math.pi))
        * math.exp(-(((i - mean) / (2.0 * sigma)) ** 2))
        for i in range(K)
    ]
    s = sum(raw)
    return [v / s for v in raw]


def _sse_tile(x):
    """Sum of squares of x, broadcast into a lane-dense (1, 8, 128) tile."""
    s = x * x
    s = jnp.sum(s, axis=2, keepdims=True)
    s = jnp.sum(s, axis=1, keepdims=True)
    s = jnp.sum(s, axis=0, keepdims=True)          # (1, 1, 1)
    return jnp.broadcast_to(s, (1, 8, 128))


def _blur_loss_kernel(o_ref, g_ref, blur_out_ref, orig_out_ref,
                      *, k1, K, pad, alpha):
    # o_ref / g_ref         : (TB, H, W) raw (unpadded) image blocks
    # blur_out_ref          : (1, 8, 128) per-block sum((blur(o)-blur(g))**2)
    # orig_out_ref          : (1, 8, 128) per-block sum((o-g)**2)
    o = o_ref[...].astype(jnp.float32)
    g = g_ref[...].astype(jnp.float32)
    H, W = o.shape[1], o.shape[2]

    # Blur is linear: MSE(blur(o), blur(g)) only needs blur(o - g).
    d0 = o - g

    if alpha != 1.0:
        orig_out_ref[...] = _sse_tile(d0)
    else:
        orig_out_ref[...] = jnp.zeros((1, 8, 128), jnp.float32)

    # In-kernel reflect padding by `pad` (static width-1 slices, no HBM pass).
    d = d0
    if pad > 0:
        top = [d[:, j:j + 1, :] for j in range(pad, 0, -1)]           # rows pad..1
        bot = [d[:, H - 2 - j:H - 1 - j, :] for j in range(pad)]      # rows H-2..H-1-pad
        d = jnp.concatenate(top + [d] + bot, axis=1)
        left = [d[:, :, j:j + 1] for j in range(pad, 0, -1)]
        right = [d[:, :, W - 2 - j:W - 1 - j] for j in range(pad)]
        d = jnp.concatenate(left + [d] + right, axis=2)
    Hp, Wp = H + 2 * pad, W + 2 * pad
    Ho, Wo = Hp - K + 1, Wp - K + 1

    # Separable Gaussian: K-tap vertical pass then K-tap horizontal pass
    # (2K FMAs/pixel instead of K*K), taps baked in as scalar constants.
    tmp = k1[0] * d[:, 0:Ho, :]
    for u in range(1, K):
        tmp = tmp + k1[u] * d[:, u:u + Ho, :]
    blur = k1[0] * tmp[:, :, 0:Wo]
    for v in range(1, K):
        blur = blur + k1[v] * tmp[:, :, v:v + Wo]

    blur_out_ref[...] = _sse_tile(blur)


def gaussian_blurred_loss(output, gt_img, *, kernel_size, alpha=1.0, sigma=2.0,
                          img_hw=(IMG_H, IMG_W), max_batch_tile=128):
    """Pallas equivalent of GaussianBlurredLoss(kernel_size, alpha).forward
    for the unflatten=True path (inputs are (B, 784) flattened 28x28 images)."""
    B = output.shape[0]
    H, W = img_hw
    K = 2 * kernel_size + 1
    pad = (kernel_size - 1) // 2          # reproduces the module's formula
    Ho, Wo = H + 2 * pad - K + 1, W + 2 * pad - K + 1
    k1 = _gaussian_taps_1d(kernel_size, sigma)

    # Keep native dtype; the upcast to f32 happens inside the kernel.
    o3 = output.reshape(B, H, W)
    g3 = gt_img.reshape(B, H, W)

    # Batch tile: cap so double-buffered input blocks + temporaries fit VMEM
    # on every generation (v7x: 64 MiB physical / 32 MiB scoped default).
    TB = B if B <= max_batch_tile else max_batch_tile
    G = pl.cdiv(B, TB)
    B_pad = G * TB
    if B_pad != B:
        # zero rows contribute 0 to both partial sums; denominators use true B
        o3 = jnp.pad(o3, ((0, B_pad - B), (0, 0), (0, 0)))
        g3 = jnp.pad(g3, ((0, B_pad - B), (0, 0), (0, 0)))

    kernel = functools.partial(_blur_loss_kernel, k1=k1, K=K, pad=pad,
                               alpha=float(alpha))
    part_spec = pl.BlockSpec((1, 8, 128), lambda i: (i, 0, 0))
    blur_parts, orig_parts = pl.pallas_call(
        kernel,
        out_shape=(jax.ShapeDtypeStruct((G, 8, 128), jnp.float32),
                   jax.ShapeDtypeStruct((G, 8, 128), jnp.float32)),
        grid=(G,),
        in_specs=[pl.BlockSpec((TB, H, W), lambda i: (i, 0, 0)),
                  pl.BlockSpec((TB, H, W), lambda i: (i, 0, 0))],
        out_specs=(part_spec, part_spec),
        compiler_params=pltpu.CompilerParams(
            dimension_semantics=("parallel",),
            vmem_limit_bytes=32 * 1024 * 1024),
    )(o3, g3)

    blur_sse = jnp.sum(blur_parts[:, 0, 0])
    loss = alpha * blur_sse / float(B * Ho * Wo)
    if alpha != 1.0:
        orig_sse = jnp.sum(orig_parts[:, 0, 0])
        loss = loss + (1.0 - alpha) * orig_sse / float(B * H * W)
    return loss


def _ref_loss(output, gt_img, kernel_size, alpha, sigma=2.0):
    """Pure-JAX reference mirroring the PyTorch forward."""
    B = output.shape[0]
    K = 2 * kernel_size + 1
    pad = (kernel_size - 1) // 2
    t1 = jnp.asarray(_gaussian_taps_1d(kernel_size, sigma), jnp.float32)
    w = (t1[:, None] * t1[None, :]).reshape(1, 1, K, K)

    def blur(x):
        img = x.reshape(B, 1, IMG_H, IMG_W).astype(jnp.float32)
        if pad > 0:
            img = jnp.pad(img, ((0, 0), (0, 0), (pad, pad), (pad, pad)),
                          mode="reflect")
        y = lax.conv_general_dilated(img, w, (1, 1), "VALID",
                                     dimension_numbers=("NCHW", "OIHW", "NCHW"))
        return y.reshape(B, -1)

    bo, bg = blur(output), blur(gt_img)
    return (alpha * jnp.mean((bo - bg) ** 2)
            + (1.0 - alpha) * jnp.mean((output - gt_img) ** 2))


if __name__ == "__main__":
    key = jax.random.PRNGKey(0)
    ka, kb = jax.random.split(key)
    # unflatten=True path -> inputs are flattened 28x28 single-channel images
    output = jax.random.uniform(ka, (2, 784), dtype=jnp.float32)
    gt_img = jax.random.uniform(kb, (2, 784), dtype=jnp.float32)

    kernel_size, alpha = 3, 0.7   # conv kernel is 7x7, reflect pad = 1
    loss = gaussian_blurred_loss(output, gt_img,
                                 kernel_size=kernel_size, alpha=alpha)
    loss = jax.block_until_ready(loss)

    ref = _ref_loss(output, gt_img, kernel_size, alpha)
    assert jnp.allclose(loss, ref, rtol=1e-5, atol=1e-6), (float(loss), float(ref))
    print("KERNEL_OK")
</pallas_src>

<mosaic_0001>
module attributes {stable_mosaic.version = 11 : i64} {
  func.func @_blur_loss_kernel(%arg0: i32, %arg1: memref<2x28x28xf32, #tpu.memory_space<vmem>>, %arg2: memref<2x28x28xf32, #tpu.memory_space<vmem>>, %arg3: memref<1x8x128xf32, #tpu.memory_space<vmem>>, %arg4: memref<1x8x128xf32, #tpu.memory_space<vmem>>) attributes {dimension_semantics = [#tpu.dimension_semantics<parallel>], iteration_bounds = array<i64: 1>, scalar_prefetch = 0 : i64, scratch_operands = 0 : i64, tpu.core_type = #tpu.core_type<tc>, window_params = [{transform_indices = @transform_0, window_bounds = array<i64: 2, 28, 28>}, {transform_indices = @transform_1, window_bounds = array<i64: 2, 28, 28>}, {transform_indices = @transform_2, window_bounds = array<i64: 1, 8, 128>}, {transform_indices = @transform_3, window_bounds = array<i64: 1, 8, 128>}]} {
    %c0 = arith.constant 0 : index
    %c0_0 = arith.constant 0 : index
    %c0_1 = arith.constant 0 : index
    %0 = vector.load %arg1[%c0, %c0_0, %c0_1] : memref<2x28x28xf32, #tpu.memory_space<vmem>>, vector<2x28x28xf32>
    %c0_2 = arith.constant 0 : index
    %c0_3 = arith.constant 0 : index
    %c0_4 = arith.constant 0 : index
    %1 = vector.load %arg2[%c0_2, %c0_3, %c0_4] : memref<2x28x28xf32, #tpu.memory_space<vmem>>, vector<2x28x28xf32>
    %2 = arith.subf %0, %1 : vector<2x28x28xf32>
    %3 = arith.mulf %2, %2 : vector<2x28x28xf32>
    %cst = arith.constant dense<0.000000e+00> : vector<2x28xf32>
    %4 = vector.multi_reduction <add>, %3, %cst [2] : vector<2x28x28xf32> to vector<2x28xf32>
    %5 = vector.shape_cast %4 : vector<2x28xf32> to vector<2x28x1xf32>
    %cst_5 = arith.constant dense<0.000000e+00> : vector<2x1xf32>
    %6 = vector.multi_reduction <add>, %5, %cst_5 [1] : vector<2x28x1xf32> to vector<2x1xf32>
    %7 = vector.shape_cast %6 : vector<2x1xf32> to vector<2x1x1xf32>
    %cst_6 = arith.constant dense<0.000000e+00> : vector<1x1xf32>
    %8 = vector.multi_reduction <add>, %7, %cst_6 [0] : vector<2x1x1xf32> to vector<1x1xf32>
    %9 = vector.shape_cast %8 : vector<1x1xf32> to vector<1x1x1xf32>
    %10 = vector.shape_cast %9 : vector<1x1x1xf32> to vector<1x1x1xf32>
    %11 = vector.broadcast %10 : vector<1x1x1xf32> to vector<1x8x128xf32>
    %c0_7 = arith.constant 0 : index
    %c0_8 = arith.constant 0 : index
    %c0_9 = arith.constant 0 : index
    %12 = vector.load %arg4[%c0_7, %c0_8, %c0_9] : memref<1x8x128xf32, #tpu.memory_space<vmem>>, vector<1x8x128xf32>
    tpu.vector_store %arg4[%c0_7, %c0_8, %c0_9], %11 {strides = array<i32>} : memref<1x8x128xf32, #tpu.memory_space<vmem>>, vector<1x8x128xf32>,
    %13 = vector.extract_strided_slice %2 {offsets = [0, 1, 0], sizes = [2, 1, 28], strides = [1, 1, 1]} : vector<2x28x28xf32> to vector<2x1x28xf32>
    %14 = vector.extract_strided_slice %2 {offsets = [0, 26, 0], sizes = [2, 1, 28], strides = [1, 1, 1]} : vector<2x28x28xf32> to vector<2x1x28xf32>
    %15 = tpu.concatenate %13, %2, %14 in 1 : vector<2x1x28xf32>, vector<2x28x28xf32>, vector<2x1x28xf32> -> vector<2x30x28xf32>
    %16 = vector.extract_strided_slice %15 {offsets = [0, 0, 1], sizes = [2, 30, 1], strides = [1, 1, 1]} : vector<2x30x28xf32> to vector<2x30x1xf32>
    %17 = vector.extract_strided_slice %15 {offsets = [0, 0, 26], sizes = [2, 30, 1], strides = [1, 1, 1]} : vector<2x30x28xf32> to vector<2x30x1xf32>
    %18 = tpu.concatenate %16, %15, %17 in 2 : vector<2x30x1xf32>, vector<2x30x28xf32>, vector<2x30x1xf32> -> vector<2x30x30xf32>
    %19 = vector.extract_strided_slice %18 {offsets = [0, 0, 0], sizes = [2, 24, 30], strides = [1, 1, 1]} : vector<2x30x30xf32> to vector<2x24x30xf32>
    %cst_10 = arith.constant 0.102184989 : f32
    %20 = vector.broadcast %cst_10 : f32 to vector<2x24x30xf32>
    %21 = arith.mulf %20, %19 : vector<2x24x30xf32>
    %22 = vector.extract_strided_slice %18 {offsets = [0, 1, 0], sizes = [2, 24, 30], strides = [1, 1, 1]} : vector<2x30x30xf32> to vector<2x24x30xf32>
    %cst_11 = arith.constant 0.139670327 : f32
    %23 = vector.broadcast %cst_11 : f32 to vector<2x24x30xf32>
    %24 = arith.mulf %23, %22 : vector<2x24x30xf32>
    %25 = arith.addf %21, %24 : vector<2x24x30xf32>
    %26 = vector.extract_strided_slice %18 {offsets = [0, 2, 0], sizes = [2, 24, 30], strides = [1, 1, 1]} : vector<2x30x30xf32> to vector<2x24x30xf32>
    %cst_12 = arith.constant 0.16847457 : f32
    %27 = vector.broadcast %cst_12 : f32 to vector<2x24x30xf32>
    %28 = arith.mulf %27, %26 : vector<2x24x30xf32>
    %29 = arith.addf %25, %28 : vector<2x24x30xf32>
    %30 = vector.extract_strided_slice %18 {offsets = [0, 3, 0], sizes = [2, 24, 30], strides = [1, 1, 1]} : vector<2x30x30xf32> to vector<2x24x30xf32>
    %cst_13 = arith.constant 0.179340243 : f32
    %31 = vector.broadcast %cst_13 : f32 to vector<2x24x30xf32>
    %32 = arith.mulf %31, %30 : vector<2x24x30xf32>
    %33 = arith.addf %29, %32 : vector<2x24x30xf32>
    %34 = vector.extract_strided_slice %18 {offsets = [0, 4, 0], sizes = [2, 24, 30], strides = [1, 1, 1]} : vector<2x30x30xf32> to vector<2x24x30xf32>
    %cst_14 = arith.constant 0.16847457 : f32
    %35 = vector.broadcast %cst_14 : f32 to vector<2x24x30xf32>
    %36 = arith.mulf %35, %34 : vector<2x24x30xf32>
    %37 = arith.addf %33, %36 : vector<2x24x30xf32>
    %38 = vector.extract_strided_slice %18 {offsets = [0, 5, 0], sizes = [2, 24, 30], strides = [1, 1, 1]} : vector<2x30x30xf32> to vector<2x24x30xf32>
    %cst_15 = arith.constant 0.139670327 : f32
    %39 = vector.broadcast %cst_15 : f32 to vector<2x24x30xf32>
    %40 = arith.mulf %39, %38 : vector<2x24x30xf32>
    %41 = arith.addf %37, %40 : vector<2x24x30xf32>
    %42 = vector.extract_strided_slice %18 {offsets = [0, 6, 0], sizes = [2, 24, 30], strides = [1, 1, 1]} : vector<2x30x30xf32> to vector<2x24x30xf32>
    %cst_16 = arith.constant 0.102184989 : f32
    %43 = vector.broadcast %cst_16 : f32 to vector<2x24x30xf32>
    %44 = arith.mulf %43, %42 : vector<2x24x30xf32>
    %45 = arith.addf %41, %44 : vector<2x24x30xf32>
    %46 = vector.extract_strided_slice %45 {offsets = [0, 0, 0], sizes = [2, 24, 24], strides = [1, 1, 1]} : vector<2x24x30xf32> to vector<2x24x24xf32>
    %cst_17 = arith.constant 0.102184989 : f32
    %47 = vector.broadcast %cst_17 : f32 to vector<2x24x24xf32>
    %48 = arith.mulf %47, %46 : vector<2x24x24xf32>
    %49 = vector.extract_strided_slice %45 {offsets = [0, 0, 1], sizes = [2, 24, 24], strides = [1, 1, 1]} : vector<2x24x30xf32> to vector<2x24x24xf32>
    %cst_18 = arith.constant 0.139670327 : f32
    %50 = vector.broadcast %cst_18 : f32 to vector<2x24x24xf32>
    %51 = arith.mulf %50, %49 : vector<2x24x24xf32>
    %52 = arith.addf %48, %51 : vector<2x24x24xf32>
    %53 = vector.extract_strided_slice %45 {offsets = [0, 0, 2], sizes = [2, 24, 24], strides = [1, 1, 1]} : vector<2x24x30xf32> to vector<2x24x24xf32>
    %cst_19 = arith.constant 0.16847457 : f32
    %54 = vector.broadcast %cst_19 : f32 to vector<2x24x24xf32>
    %55 = arith.mulf %54, %53 : vector<2x24x24xf32>
    %56 = arith.addf %52, %55 : vector<2x24x24xf32>
    %57 = vector.extract_strided_slice %45 {offsets = [0, 0, 3], sizes = [2, 24, 24], strides = [1, 1, 1]} : vector<2x24x30xf32> to vector<2x24x24xf32>
    %cst_20 = arith.constant 0.179340243 : f32
    %58 = vector.broadcast %cst_20 : f32 to vector<2x24x24xf32>
    %59 = arith.mulf %58, %57 : vector<2x24x24xf32>
    %60 = arith.addf %56, %59 : vector<2x24x24xf32>
    %61 = vector.extract_strided_slice %45 {offsets = [0, 0, 4], sizes = [2, 24, 24], strides = [1, 1, 1]} : vector<2x24x30xf32> to vector<2x24x24xf32>
    %cst_21 = arith.constant 0.16847457 : f32
    %62 = vector.broadcast %cst_21 : f32 to vector<2x24x24xf32>
    %63 = arith.mulf %62, %61 : vector<2x24x24xf32>
    %64 = arith.addf %60, %63 : vector<2x24x24xf32>
    %65 = vector.extract_strided_slice %45 {offsets = [0, 0, 5], sizes = [2, 24, 24], strides = [1, 1, 1]} : vector<2x24x30xf32> to vector<2x24x24xf32>
    %cst_22 = arith.constant 0.139670327 : f32
    %66 = vector.broadcast %cst_22 : f32 to vector<2x24x24xf32>
    %67 = arith.mulf %66, %65 : vector<2x24x24xf32>
    %68 = arith.addf %64, %67 : vector<2x24x24xf32>
    %69 = vector.extract_strided_slice %45 {offsets = [0, 0, 6], sizes = [2, 24, 24], strides = [1, 1, 1]} : vector<2x24x30xf32> to vector<2x24x24xf32>
    %cst_23 = arith.constant 0.102184989 : f32
    %70 = vector.broadcast %cst_23 : f32 to vector<2x24x24xf32>
    %71 = arith.mulf %70, %69 : vector<2x24x24xf32>
    %72 = arith.addf %68, %71 : vector<2x24x24xf32>
    %73 = arith.mulf %72, %72 : vector<2x24x24xf32>
    %cst_24 = arith.constant dense<0.000000e+00> : vector<2x24xf32>
    %74 = vector.multi_reduction <add>, %73, %cst_24 [2] : vector<2x24x24xf32> to vector<2x24xf32>
    %75 = vector.shape_cast %74 : vector<2x24xf32> to vector<2x24x1xf32>
    %cst_25 = arith.constant dense<0.000000e+00> : vector<2x1xf32>
    %76 = vector.multi_reduction <add>, %75, %cst_25 [1] : vector<2x24x1xf32> to vector<2x1xf32>
    %77 = vector.shape_cast %76 : vector<2x1xf32> to vector<2x1x1xf32>
    %cst_26 = arith.constant dense<0.000000e+00> : vector<1x1xf32>
    %78 = vector.multi_reduction <add>, %77, %cst_26 [0] : vector<2x1x1xf32> to vector<1x1xf32>
    %79 = vector.shape_cast %78 : vector<1x1xf32> to vector<1x1x1xf32>
    %80 = vector.shape_cast %79 : vector<1x1x1xf32> to vector<1x1x1xf32>
    %81 = vector.broadcast %80 : vector<1x1x1xf32> to vector<1x8x128xf32>
    %c0_27 = arith.constant 0 : index
    %c0_28 = arith.constant 0 : index
    %c0_29 = arith.constant 0 : index
    %82 = vector.load %arg3[%c0_27, %c0_28, %c0_29] : memref<1x8x128xf32, #tpu.memory_space<vmem>>, vector<1x8x128xf32>
    tpu.vector_store %arg3[%c0_27, %c0_28, %c0_29], %81 {strides = array<i32>} : memref<1x8x128xf32, #tpu.memory_space<vmem>>, vector<1x8x128xf32>,
    return
  }
  func.func @transform_0(%arg0: i32) -> (i32, i32, i32) {
    %c0_i32 = arith.constant 0 : i32
    %c0_i32_0 = arith.constant 0 : i32
    %c0_i32_1 = arith.constant 0 : i32
    return %arg0, %c0_i32, %c0_i32_0 : i32, i32, i32
  }
  func.func @transform_1(%arg0: i32) -> (i32, i32, i32) {
    %c0_i32 = arith.constant 0 : i32
    %c0_i32_0 = arith.constant 0 : i32
    %c0_i32_1 = arith.constant 0 : i32
    return %arg0, %c0_i32, %c0_i32_0 : i32, i32, i32
  }
  func.func @transform_2(%arg0: i32) -> (i32, i32, i32) {
    %c0_i32 = arith.constant 0 : i32
    %c0_i32_0 = arith.constant 0 : i32
    %c0_i32_1 = arith.constant 0 : i32
    return %arg0, %c0_i32, %c0_i32_0 : i32, i32, i32
  }
  func.func @transform_3(%arg0: i32) -> (i32, i32, i32) {
    %c0_i32 = arith.constant 0 : i32
    %c0_i32_0 = arith.constant 0 : i32
    %c0_i32_1 = arith.constant 0 : i32
    return %arg0, %c0_i32, %c0_i32_0 : i32, i32, i32
  }
}

</mosaic_0001>

<llo_original>
// kernel: tpu_custom_call.1
$region0: #{tpu_custom_call.1}
  #allocation0 [shape = 'u32[]', space=smem, size = 0x4, offset = 0x4, fixed_abs, tag = 'smem constant byte address 0x4 - core index']
  #allocation1 [shape = 'u32[144,128]{1,0:T(1,128)}', space=vmem, size = 0x12000, scoped, tag = 'internal scratch']
  %s0 = inlined_call_operand.vmem [shape: f32[2,28,28], index: 0, kind: input, shape index: {}]
  %s1 = inlined_call_operand.vmem [shape: f32[2,28,28], index: 1, kind: input, shape index: {}]
  %s2 = inlined_call_operand.hbm [shape: f32[1,8,128], index: 2, kind: output, shape index: {0}]
  %s3 = inlined_call_operand.hbm [shape: f32[1,8,128], index: 3, kind: output, shape index: {1}]
  %4 = xla_tuple %s2, %s3
  %s5 = sld [smem:[#allocation0]]
  $region26: #{tpu_custom_call.1} parent=0
    _
  %s7 = ssub.s32 1, %s5
  %s8 = scalar_select 0, %s7, %s5
  $region1: #{tpu_custom_call.1} parent=0
    #allocation2 [shape = 'u8[4096]{0}', space=vmem, size = 0x1000, scoped, tag = 'output window, operand 0, single buffered']
    #allocation3 [shape = 's32[1]{0}', space=sflag, size = 0x4, scoped, tag = 'scoped memory for tpu_custom_call.1']
    #allocation4 [shape = 'u8[4096]{0}', space=vmem, size = 0x1000, scoped, tag = 'output window, operand 1, single buffered']
    #allocation5 [shape = 's32[1]{0}', space=sflag, size = 0x4, scoped, tag = 'scoped memory for tpu_custom_call.1']
    %9 = vsyncpa [#allocation3], 0
    %10 = vsyncpa [#allocation5], 0
    // Predicated region
    $region2: #{tpu_custom_call.1} parent=1 // pred_check
      _
    $region3: #{tpu_custom_call.1} parent=1 // pred_check_branch
      %12 = sbr.rel (0) target = $region5
    $region4: #{tpu_custom_call.1} parent=1 // pred_region
      _
    $region5: #{tpu_custom_call.1} parent=1 // pred_fallthru
      _
    // Predicated region
    $region6: #{tpu_custom_call.1} parent=1 // pred_check
      _
    $region7: #{tpu_custom_call.1} parent=1 // pred_check_branch
      %14 = sbr.rel (0) target = $region9
    $region8: #{tpu_custom_call.1} parent=1 // pred_region
      _
    $region9: #{tpu_custom_call.1} parent=1 // pred_fallthru
      _
    %v15 = vld [vmem:[%s0] sm:$0xff]
    %v16 = vld [vmem:[%s0 + $0x8] sm:$0xff]
    %v17 = vld [vmem:[%s0 + $0x10] sm:$0xff]
    %v18 = vld [vmem:[%s0 + $0x18] sm:$0xf]
    %v19 = vld [vmem:[%s0 + $0x20] sm:$0xff]
    %v20 = vld [vmem:[%s0 + $0x28] sm:$0xff]
    %v21 = vld [vmem:[%s0 + $0x30] sm:$0xff]
    %v22 = vld [vmem:[%s0 + $0x38] sm:$0xf]
    %v23 = vld [vmem:[%s1] sm:$0xff]
    %v24 = vld [vmem:[%s1 + $0x8] sm:$0xff]
    %v25 = vld [vmem:[%s1 + $0x10] sm:$0xff]
    %v26 = vld [vmem:[%s1 + $0x18] sm:$0xf]
    %v27 = vld [vmem:[%s1 + $0x20] sm:$0xff]
    %v28 = vld [vmem:[%s1 + $0x28] sm:$0xff]
    %v29 = vld [vmem:[%s1 + $0x30] sm:$0xff]
    %v30 = vld [vmem:[%s1 + $0x38] sm:$0xf]
    %v31 = vsub.f32 %v15, %v23
    %v32 = vsub.f32 %v16, %v24
    %v33 = vsub.f32 %v17, %v25
    %v34 = vsub.f32 %v18, %v26
    %v35 = vsub.f32 %v19, %v27
    %v36 = vsub.f32 %v20, %v28
    %v37 = vsub.f32 %v21, %v29
    %v38 = vsub.f32 %v22, %v30
    %v39 = vmul.f32 %v31, %v31
    %v40 = vmul.f32 %v32, %v32
    %v41 = vmul.f32 %v33, %v33
    %v42 = vmul.f32 %v34, %v34
    %v43 = vmul.f32 %v35, %v35
    %v44 = vmul.f32 %v36, %v36
    %v45 = vmul.f32 %v37, %v37
    %v46 = vmul.f32 %v38, %v38
    %vm47 = vcmask 228352
    %v48 = vsel %vm47, %v39, 0.0
    %49 = vadd.xlane.f32.xlu0 %v48
    %v50 = vpop.xlane.xlu0 %49
    %v51 = vsel %vm47, %v40, 0.0
    %52 = vadd.xlane.f32.xlu0 %v51
    %v53 = vpop.xlane.xlu0 %52
    %v54 = vsel %vm47, %v41, 0.0
    %55 = vadd.xlane.f32.xlu0 %v54
    %v56 = vpop.xlane.xlu0 %55
    %vm57 = vcmask 224256
    %v58 = vsel %vm57, %v42, 0.0
    %59 = vadd.xlane.f32.xlu0 %v58
    %v60 = vpop.xlane.xlu0 %59
    %v61 = vsel %vm47, %v43, 0.0
    %62 = vadd.xlane.f32.xlu0 %v61
    %v63 = vpop.xlane.xlu0 %62
    %v64 = vsel %vm47, %v44, 0.0
    %65 = vadd.xlane.f32.xlu0 %v64
    %v66 = vpop.xlane.xlu0 %65
    %v67 = vsel %vm47, %v45, 0.0
    %68 = vadd.xlane.f32.xlu0 %v67
    %v69 = vpop.xlane.xlu0 %68
    %v70 = vsel %vm57, %v46, 0.0
    %71 = vadd.xlane.f32.xlu0 %v70
    %v72 = vpop.xlane.xlu0 %71
    %v73 = vadd.f32 %v50, %v53
    %v74 = vadd.f32 %v73, %v56
    %vm75 = vcmask 1043456
    %v76 = vsel %vm75, %v60, 0.0
    %v77 = vadd.f32 %v74, %v76
    %v78 = vrot.slane %v77, 4
    %v79 = vadd.f32 %v77, %v78
    %v80 = vrot.slane %v79, 2
    %v81 = vadd.f32 %v79, %v80
    %v82 = vrot.slane %v81, 1
    %v83 = vadd.f32 %v81, %v82
    %v84 = vadd.f32 %v63, %v66
    %v85 = vadd.f32 %v84, %v69
    %v86 = vsel %vm75, %v72, 0.0
    %v87 = vadd.f32 %v85, %v86
    %v88 = vrot.slane %v87, 4
    %v89 = vadd.f32 %v87, %v88
    %v90 = vrot.slane %v89, 2
    %v91 = vadd.f32 %v89, %v90
    %v92 = vrot.slane %v91, 1
    %v93 = vadd.f32 %v91, %v92
    %v94 = vadd.f32 %v83, %v93
    %95 = vst [vmem:[#allocation4] sm:$0xff] %v94
    %v98 = vrot.slane %v31, 1
    %v99 = vrot.slane %v35, 1
    %vm108 = vcmask 1040384
    %v109 = vrot.slane %v31, 7
    %v110 = vrot.slane %v32, 7
    %v111 = vsel %vm108, %v109, %v110
    %v112 = vrot.slane %v33, 7
    %v113 = vsel %vm108, %v110, %v112
    %v114 = vrot.slane %v34, 7
    %v115 = vsel %vm108, %v112, %v114
    %v116 = vrot.slane %v35, 7
    %v117 = vrot.slane %v36, 7
    %v118 = vsel %vm108, %v116, %v117
    %v119 = vrot.slane %v37, 7
    %v120 = vsel %vm108, %v117, %v119
    %v121 = vrot.slane %v38, 7
    %v122 = vsel %vm108, %v119, %v121
    %v127 = vrot.slane %v34, 5
    %v128 = vrot.slane %v38, 5
    %v131 = vsel %vm108, %v98, %v109
    %v132 = vsel %vm108, %v99, %v116
    %vm133 = vcmask 1044480
    %v134 = vsel %vm133, %v115, %v127
    %v135 = vsel %vm133, %v122, %v128
    %140 = vrot.lane.b32.xlu0 %v131, 127
    %v141 = vpop.permute.xlu0 %140
    %142 = vrot.lane.b32.xlu0 %v111, 127
    %v143 = vpop.permute.xlu0 %142
    %144 = vrot.lane.b32.xlu0 %v113, 127
    %v145 = vpop.permute.xlu0 %144
    %146 = vrot.lane.b32.xlu0 %v134, 127
    %v147 = vpop.permute.xlu0 %146
    %148 = vrot.lane.b32.xlu0 %v132, 127
    %v149 = vpop.permute.xlu0 %148
    %150 = vrot.lane.b32.xlu0 %v118, 127
    %v151 = vpop.permute.xlu0 %150
    %152 = vrot.lane.b32.xlu0 %v120, 127
    %v153 = vpop.permute.xlu0 %152
    %154 = vrot.lane.b32.xlu0 %v135, 127
    %v155 = vpop.permute.xlu0 %154
    %164 = vrot.lane.b32.xlu0 %v131, 1
    %v165 = vpop.permute.xlu0 %164
    %166 = vrot.lane.b32.xlu0 %v111, 1
    %v167 = vpop.permute.xlu0 %166
    %168 = vrot.lane.b32.xlu0 %v113, 1
    %v169 = vpop.permute.xlu0 %168
    %170 = vrot.lane.b32.xlu0 %v134, 1
    %v171 = vpop.permute.xlu0 %170
    %172 = vrot.lane.b32.xlu0 %v132, 1
    %v173 = vpop.permute.xlu0 %172
    %174 = vrot.lane.b32.xlu0 %v118, 1
    %v175 = vpop.permute.xlu0 %174
    %176 = vrot.lane.b32.xlu0 %v120, 1
    %v177 = vpop.permute.xlu0 %176
    %178 = vrot.lane.b32.xlu0 %v135, 1
    %v179 = vpop.permute.xlu0 %178
    %188 = vrot.lane.b32.xlu0 %v131, 3
    %v189 = vpop.permute.xlu0 %188
    %190 = vrot.lane.b32.xlu0 %v111, 3
    %v191 = vpop.permute.xlu0 %190
    %192 = vrot.lane.b32.xlu0 %v113, 3
    %v193 = vpop.permute.xlu0 %192
    %194 = vrot.lane.b32.xlu0 %v134, 3
    %v195 = vpop.permute.xlu0 %194
    %196 = vrot.lane.b32.xlu0 %v132, 3
    %v197 = vpop.permute.xlu0 %196
    %198 = vrot.lane.b32.xlu0 %v118, 3
    %v199 = vpop.permute.xlu0 %198
    %200 = vrot.lane.b32.xlu0 %v120, 3
    %v201 = vpop.permute.xlu0 %200
    %202 = vrot.lane.b32.xlu0 %v135, 3
    %v203 = vpop.permute.xlu0 %202
    %vm212 = vcmask 7168
    %v213 = vsel %vm212, %v141, %v165
    %v214 = vsel %vm212, %v143, %v167
    %v215 = vsel %vm212, %v145, %v169
    %v216 = vsel %vm212, %v147, %v171
    %v217 = vsel %vm212, %v149, %v173
    %v218 = vsel %vm212, %v151, %v175
    %v219 = vsel %vm212, %v153, %v177
    %v220 = vsel %vm212, %v155, %v179
    %vm221 = vcmask 236544
    %v222 = vsel %vm221, %v213, %v189
    %v223 = vsel %vm221, %v214, %v191
    %v224 = vsel %vm221, %v215, %v193
    %v225 = vsel %vm221, %v216, %v195
    %v226 = vsel %vm221, %v217, %v197
    %v227 = vsel %vm221, %v218, %v199
    %v228 = vsel %vm221, %v219, %v201
    %v229 = vsel %vm221, %v220, %v203
    %v230 = vmul.f32 %v222, 0.10218499
    %v231 = vmul.f32 %v223, 0.10218499
    %v232 = vmul.f32 %v224, 0.10218499
    %v233 = vmul.f32 %v226, 0.10218499
    %v234 = vmul.f32 %v227, 0.10218499
    %v235 = vmul.f32 %v228, 0.10218499
    %v236 = vmul.f32 %v222, 0.13967033
    %v237 = vmul.f32 %v223, 0.13967033
    %v238 = vmul.f32 %v224, 0.13967033
    %v239 = vmul.f32 %v225, 0.13967033
    %v240 = vmul.f32 %v226, 0.13967033
    %v241 = vmul.f32 %v227, 0.13967033
    %v242 = vmul.f32 %v228, 0.13967033
    %v243 = vmul.f32 %v229, 0.13967033
    %vm252 = vcmask 1046528
    %v253 = vrot.slane %v236, 1
    %v254 = vrot.slane %v237, 1
    %v255 = vsel %vm252, %v253, %v254
    %v256 = vrot.slane %v238, 1
    %v257 = vsel %vm252, %v254, %v256
    %v258 = vrot.slane %v239, 1
    %v259 = vsel %vm252, %v256, %v258
    %v260 = vrot.slane %v240, 1
    %v261 = vrot.slane %v241, 1
    %v262 = vsel %vm252, %v260, %v261
    %v263 = vrot.slane %v242, 1
    %v264 = vsel %vm252, %v261, %v263
    %v265 = vrot.slane %v243, 1
    %v266 = vsel %vm252, %v263, %v265
    %v273 = vadd.f32 %v230, %v255
    %v274 = vadd.f32 %v231, %v257
    %v275 = vadd.f32 %v232, %v259
    %v276 = vadd.f32 %v233, %v262
    %v277 = vadd.f32 %v234, %v264
    %v278 = vadd.f32 %v235, %v266
    %v279 = vmul.f32 %v222, 0.16847457
    %v280 = vmul.f32 %v223, 0.16847457
    %v281 = vmul.f32 %v224, 0.16847457
    %v282 = vmul.f32 %v225, 0.16847457
    %v283 = vmul.f32 %v226, 0.16847457
    %v284 = vmul.f32 %v227, 0.16847457
    %v285 = vmul.f32 %v228, 0.16847457
    %v286 = vmul.f32 %v229, 0.16847457
    %vm295 = vcmask 1045504
    %v296 = vrot.slane %v279, 2
    %v297 = vrot.slane %v280, 2
    %v298 = vsel %vm295, %v296, %v297
    %v299 = vrot.slane %v281, 2
    %v300 = vsel %vm295, %v297, %v299
    %v301 = vrot.slane %v282, 2
    %v302 = vsel %vm295, %v299, %v301
    %v303 = vrot.slane %v283, 2
    %v304 = vrot.slane %v284, 2
    %v305 = vsel %vm295, %v303, %v304
    %v306 = vrot.slane %v285, 2
    %v307 = vsel %vm295, %v304, %v306
    %v308 = vrot.slane %v286, 2
    %v309 = vsel %vm295, %v306, %v308
    %v316 = vadd.f32 %v273, %v298
    %v317 = vadd.f32 %v274, %v300
    %v318 = vadd.f32 %v275, %v302
    %v319 = vadd.f32 %v276, %v305
    %v320 = vadd.f32 %v277, %v307
    %v321 = vadd.f32 %v278, %v309
    %v322 = vmul.f32 %v222, 0.17934024
    %v323 = vmul.f32 %v223, 0.17934024
    %v324 = vmul.f32 %v224, 0.17934024
    %v325 = vmul.f32 %v225, 0.17934024
    %v326 = vmul.f32 %v226, 0.17934024
    %v327 = vmul.f32 %v227, 0.17934024
    %v328 = vmul.f32 %v228, 0.17934024
    %v329 = vmul.f32 %v229, 0.17934024
    %v338 = vrot.slane %v322, 3
    %v339 = vrot.slane %v323, 3
    %v340 = vsel %vm133, %v338, %v339
    %v341 = vrot.slane %v324, 3
    %v342 = vsel %vm133, %v339, %v341
    %v343 = vrot.slane %v325, 3
    %v344 = vsel %vm133, %v341, %v343
    %v345 = vrot.slane %v326, 3
    %v346 = vrot.slane %v327, 3
    %v347 = vsel %vm133, %v345, %v346
    %v348 = vrot.slane %v328, 3
    %v349 = vsel %vm133, %v346, %v348
    %v350 = vrot.slane %v329, 3
    %v351 = vsel %vm133, %v348, %v350
    %v358 = vadd.f32 %v316, %v340
    %v359 = vadd.f32 %v317, %v342
    %v360 = vadd.f32 %v318, %v344
    %v361 = vadd.f32 %v319, %v347
    %v362 = vadd.f32 %v320, %v349
    %v363 = vadd.f32 %v321, %v351
    %v364 = vrot.slane %v279, 4
    %v365 = vrot.slane %v280, 4
    %v366 = vsel %vm75, %v364, %v365
    %v367 = vrot.slane %v281, 4
    %v368 = vsel %vm75, %v365, %v367
    %v369 = vrot.slane %v282, 4
    %v370 = vsel %vm75, %v367, %v369
    %v371 = vrot.slane %v283, 4
    %v372 = vrot.slane %v284, 4
    %v373 = vsel %vm75, %v371, %v372
    %v374 = vrot.slane %v285, 4
    %v375 = vsel %vm75, %v372, %v374
    %v376 = vrot.slane %v286, 4
    %v377 = vsel %vm75, %v374, %v376
    %v384 = vadd.f32 %v358, %v366
    %v385 = vadd.f32 %v359, %v368
    %v386 = vadd.f32 %v360, %v370
    %v387 = vadd.f32 %v361, %v373
    %v388 = vadd.f32 %v362, %v375
    %v389 = vadd.f32 %v363, %v377
    %vm390 = vcmask 1042432
    %v391 = vrot.slane %v236, 5
    %v392 = vrot.slane %v237, 5
    %v393 = vsel %vm390, %v391, %v392
    %v394 = vrot.slane %v238, 5
    %v395 = vsel %vm390, %v392, %v394
    %v396 = vrot.slane %v239, 5
    %v397 = vsel %vm390, %v394, %v396
    %v398 = vrot.slane %v240, 5
    %v399 = vrot.slane %v241, 5
    %v400 = vsel %vm390, %v398, %v399
    %v401 = vrot.slane %v242, 5
    %v402 = vsel %vm390, %v399, %v401
    %v403 = vrot.slane %v243, 5
    %v404 = vsel %vm390, %v401, %v403
    %v411 = vadd.f32 %v384, %v393
    %v412 = vadd.f32 %v385, %v395
    %v413 = vadd.f32 %v386, %v397
    %v414 = vadd.f32 %v387, %v400
    %v415 = vadd.f32 %v388, %v402
    %v416 = vadd.f32 %v389, %v404
    %v417 = vmul.f32 %v225, 0.10218499
    %v418 = vmul.f32 %v229, 0.10218499
    %vm427 = vcmask 1041408
    %v428 = vrot.slane %v230, 6
    %v429 = vrot.slane %v231, 6
    %v430 = vsel %vm427, %v428, %v429
    %v431 = vrot.slane %v232, 6
    %v432 = vsel %vm427, %v429, %v431
    %v433 = vrot.slane %v417, 6
    %v434 = vsel %vm427, %v431, %v433
    %v435 = vrot.slane %v233, 6
    %v436 = vrot.slane %v234, 6
    %v437 = vsel %vm427, %v435, %v436
    %v438 = vrot.slane %v235, 6
    %v439 = vsel %vm427, %v436, %v438
    %v440 = vrot.slane %v418, 6
    %v441 = vsel %vm427, %v438, %v440
    %v448 = vadd.f32 %v411, %v430
    %v449 = vadd.f32 %v412, %v432
    %v450 = vadd.f32 %v413, %v434
    %v451 = vadd.f32 %v414, %v437
    %v452 = vadd.f32 %v415, %v439
    %v453 = vadd.f32 %v416, %v441
    %v454 = vmul.f32 %v448, 0.10218499
    %v455 = vmul.f32 %v449, 0.10218499
    %v456 = vmul.f32 %v450, 0.10218499
    %v457 = vmul.f32 %v451, 0.10218499
    %v458 = vmul.f32 %v452, 0.10218499
    %v459 = vmul.f32 %v453, 0.10218499
    %v460 = vmul.f32 %v448, 0.13967033
    %v461 = vmul.f32 %v449, 0.13967033
    %v462 = vmul.f32 %v450, 0.13967033
    %v463 = vmul.f32 %v451, 0.13967033
    %v464 = vmul.f32 %v452, 0.13967033
    %v465 = vmul.f32 %v453, 0.13967033
    %472 = vrot.lane.b32.xlu0 %v460, 127
    %v473 = vpop.permute.xlu0 %472
    %474 = vrot.lane.b32.xlu0 %v461, 127
    %v475 = vpop.permute.xlu0 %474
    %476 = vrot.lane.b32.xlu0 %v462, 127
    %v477 = vpop.permute.xlu0 %476
    %478 = vrot.lane.b32.xlu0 %v463, 127
    %v479 = vpop.permute.xlu0 %478
    %480 = vrot.lane.b32.xlu0 %v464, 127
    %v481 = vpop.permute.xlu0 %480
    %482 = vrot.lane.b32.xlu0 %v465, 127
    %v483 = vpop.permute.xlu0 %482
    %v490 = vadd.f32 %v454, %v473
    %v491 = vadd.f32 %v455, %v475
    %v492 = vadd.f32 %v456, %v477
    %v493 = vadd.f32 %v457, %v479
    %v494 = vadd.f32 %v458, %v481
    %v495 = vadd.f32 %v459, %v483
    %v496 = vmul.f32 %v448, 0.16847457
    %v497 = vmul.f32 %v449, 0.16847457
    %v498 = vmul.f32 %v450, 0.16847457
    %v499 = vmul.f32 %v451, 0.16847457
    %v500 = vmul.f32 %v452, 0.16847457
    %v501 = vmul.f32 %v453, 0.16847457
    %508 = vrot.lane.b32.xlu0 %v496, 126
    %v509 = vpop.permute.xlu0 %508
    %510 = vrot.lane.b32.xlu0 %v497, 126
    %v511 = vpop.permute.xlu0 %510
    %512 = vrot.lane.b32.xlu0 %v498, 126
    %v513 = vpop.permute.xlu0 %512
    %514 = vrot.lane.b32.xlu0 %v499, 126
    %v515 = vpop.permute.xlu0 %514
    %516 = vrot.lane.b32.xlu0 %v500, 126
    %v517 = vpop.permute.xlu0 %516
    %518 = vrot.lane.b32.xlu0 %v501, 126
    %v519 = vpop.permute.xlu0 %518
    %v526 = vadd.f32 %v490, %v509
    %v527 = vadd.f32 %v491, %v511
    %v528 = vadd.f32 %v492, %v513
    %v529 = vadd.f32 %v493, %v515
    %v530 = vadd.f32 %v494, %v517
    %v531 = vadd.f32 %v495, %v519
    %v532 = vmul.f32 %v448, 0.17934024
    %v533 = vmul.f32 %v449, 0.17934024
    %v534 = vmul.f32 %v450, 0.17934024
    %v535 = vmul.f32 %v451, 0.17934024
    %v536 = vmul.f32 %v452, 0.17934024
    %v537 = vmul.f32 %v453, 0.17934024
    %544 = vrot.lane.b32.xlu0 %v532, 125
    %v545 = vpop.permute.xlu0 %544
    %546 = vrot.lane.b32.xlu0 %v533, 125
    %v547 = vpop.permute.xlu0 %546
    %548 = vrot.lane.b32.xlu0 %v534, 125
    %v549 = vpop.permute.xlu0 %548
    %550 = vrot.lane.b32.xlu0 %v535, 125
    %v551 = vpop.permute.xlu0 %550
    %552 = vrot.lane.b32.xlu0 %v536, 125
    %v553 = vpop.permute.xlu0 %552
    %554 = vrot.lane.b32.xlu0 %v537, 125
    %v555 = vpop.permute.xlu0 %554
    %v562 = vadd.f32 %v526, %v545
    %v563 = vadd.f32 %v527, %v547
    %v564 = vadd.f32 %v528, %v549
    %v565 = vadd.f32 %v529, %v551
    %v566 = vadd.f32 %v530, %v553
    %v567 = vadd.f32 %v531, %v555
    %568 = vrot.lane.b32.xlu0 %v496, 124
    %v569 = vpop.permute.xlu0 %568
    %570 = vrot.lane.b32.xlu0 %v497, 124
    %v571 = vpop.permute.xlu0 %570
    %572 = vrot.lane.b32.xlu0 %v498, 124
    %v573 = vpop.permute.xlu0 %572
    %574 = vrot.lane.b32.xlu0 %v499, 124
    %v575 = vpop.permute.xlu0 %574
    %576 = vrot.lane.b32.xlu0 %v500, 124
    %v577 = vpop.permute.xlu0 %576
    %578 = vrot.lane.b32.xlu0 %v501, 124
    %v579 = vpop.permute.xlu0 %578
    %v586 = vadd.f32 %v562, %v569
    %v587 = vadd.f32 %v563, %v571
    %v588 = vadd.f32 %v564, %v573
    %v589 = vadd.f32 %v565, %v575
    %v590 = vadd.f32 %v566, %v577
    %v591 = vadd.f32 %v567, %v579
    %592 = vrot.lane.b32.xlu0 %v460, 123
    %v593 = vpop.permute.xlu0 %592
    %594 = vrot.lane.b32.xlu0 %v461, 123
    %v595 = vpop.permute.xlu0 %594
    %596 = vrot.lane.b32.xlu0 %v462, 123
    %v597 = vpop.permute.xlu0 %596
    %598 = vrot.lane.b32.xlu0 %v463, 123
    %v599 = vpop.permute.xlu0 %598
    %600 = vrot.lane.b32.xlu0 %v464, 123
    %v601 = vpop.permute.xlu0 %600
    %602 = vrot.lane.b32.xlu0 %v465, 123
    %v603 = vpop.permute.xlu0 %602
    %v610 = vadd.f32 %v586, %v593
    %v611 = vadd.f32 %v587, %v595
    %v612 = vadd.f32 %v588, %v597
    %v613 = vadd.f32 %v589, %v599
    %v614 = vadd.f32 %v590, %v601
    %v615 = vadd.f32 %v591, %v603
    %622 = vrot.lane.b32.xlu0 %v454, 122
    %v623 = vpop.permute.xlu0 %622
    %624 = vrot.lane.b32.xlu0 %v455, 122
    %v625 = vpop.permute.xlu0 %624
    %626 = vrot.lane.b32.xlu0 %v456, 122
    %v627 = vpop.permute.xlu0 %626
    %628 = vrot.lane.b32.xlu0 %v457, 122
    %v629 = vpop.permute.xlu0 %628
    %630 = vrot.lane.b32.xlu0 %v458, 122
    %v631 = vpop.permute.xlu0 %630
    %632 = vrot.lane.b32.xlu0 %v459, 122
    %v633 = vpop.permute.xlu0 %632
    %v640 = vadd.f32 %v610, %v623
    %v641 = vadd.f32 %v611, %v625
    %v642 = vadd.f32 %v612, %v627
    %v643 = vadd.f32 %v613, %v629
    %v644 = vadd.f32 %v614, %v631
    %v645 = vadd.f32 %v615, %v633
    %v646 = vmul.f32 %v640, %v640
    %v647 = vmul.f32 %v641, %v641
    %v648 = vmul.f32 %v642, %v642
    %v649 = vmul.f32 %v643, %v643
    %v650 = vmul.f32 %v644, %v644
    %v651 = vmul.f32 %v645, %v645
    %vm652 = vcmask 195584
    %v653 = vsel %vm652, %v646, 0.0
    %654 = vadd.xlane.f32.xlu0 %v653
    %v655 = vpop.xlane.xlu0 %654
    %v656 = vsel %vm652, %v647, 0.0
    %657 = vadd.xlane.f32.xlu0 %v656
    %v658 = vpop.xlane.xlu0 %657
    %v659 = vsel %vm652, %v648, 0.0
    %660 = vadd.xlane.f32.xlu0 %v659
    %v661 = vpop.xlane.xlu0 %660
    %v662 = vsel %vm652, %v649, 0.0
    %663 = vadd.xlane.f32.xlu0 %v662
    %v664 = vpop.xlane.xlu0 %663
    %v665 = vsel %vm652, %v650, 0.0
    %666 = vadd.xlane.f32.xlu0 %v665
    %v667 = vpop.xlane.xlu0 %666
    %v668 = vsel %vm652, %v651, 0.0
    %669 = vadd.xlane.f32.xlu0 %v668
    %v670 = vpop.xlane.xlu0 %669
    %v671 = vadd.f32 %v655, %v658
    %v672 = vadd.f32 %v671, %v661
    %v673 = vrot.slane %v672, 4
    %v674 = vadd.f32 %v672, %v673
    %v675 = vrot.slane %v674, 2
    %v676 = vadd.f32 %v674, %v675
    %v677 = vrot.slane %v676, 1
    %v678 = vadd.f32 %v676, %v677
    %v679 = vadd.f32 %v664, %v667
    %v680 = vadd.f32 %v679, %v670
    %v681 = vrot.slane %v680, 4
    %v682 = vadd.f32 %v680, %v681
    %v683 = vrot.slane %v682, 2
    %v684 = vadd.f32 %v682, %v683
    %v685 = vrot.slane %v684, 1
    %v686 = vadd.f32 %v684, %v685
    %v687 = vadd.f32 %v678, %v686
    %688 = vst [vmem:[#allocation2] sm:$0xff] %v687
    // Predicated region
    $region10: #{tpu_custom_call.1} parent=1 // pred_check
      _
    $region11: #{tpu_custom_call.1} parent=1 // pred_check_branch
      %690 = sbr.rel (0) target = $region13
    $region12: #{tpu_custom_call.1} parent=1 // pred_region
      %s692 = ssub.s32 128, 128
      %693 = vsyncadd [#allocation3], %s692
      %s695 = sshll.u32 [#allocation2], 4
      %s696 = int_to_ptr.vmem [resolvable:$true] %s695
      %698 = dma.vmem_to_hbm [thread:$0]  %s696, 128, %s2, [#allocation3]
    $region13: #{tpu_custom_call.1} parent=1 // pred_fallthru
      _
    // Predicated region
    $region14: #{tpu_custom_call.1} parent=1 // pred_check
      _
    $region15: #{tpu_custom_call.1} parent=1 // pred_check_branch
      %700 = sbr.rel (0) target = $region17
    $region16: #{tpu_custom_call.1} parent=1 // pred_region
      %s702 = ssub.s32 128, 128
      %703 = vsyncadd [#allocation5], %s702
      %s705 = sshll.u32 [#allocation4], 4
      %s706 = int_to_ptr.vmem [resolvable:$true] %s705
      %708 = dma.vmem_to_hbm [thread:$0]  %s706, 128, %s3, [#allocation5]
    $region17: #{tpu_custom_call.1} parent=1 // pred_fallthru
      _
    // Predicated region
    $region18: #{tpu_custom_call.1} parent=1 // pred_check
      _
    $region19: #{tpu_custom_call.1} parent=1 // pred_check_branch
      %710 = sbr.rel (0) target = $region21
    $region20: #{tpu_custom_call.1} parent=1 // pred_region
      %711 = dma.done [#allocation3], 128
    $region21: #{tpu_custom_call.1} parent=1 // pred_fallthru
      _
    // Predicated region
    $region22: #{tpu_custom_call.1} parent=1 // pred_check
      _
    $region23: #{tpu_custom_call.1} parent=1 // pred_check_branch
      %713 = sbr.rel (0) target = $region25
    $region24: #{tpu_custom_call.1} parent=1 // pred_region
      %714 = dma.done [#allocation5], 128
    $region25: #{tpu_custom_call.1} parent=1 // pred_fallthru
      _
    %715 = vsyncpa [#allocation3], 1
    %716 = vsyncpa [#allocation5], 1

</llo_original>
